<compile_context>
chip_gen: v7x
topology: tpu7x:2x2x1
jax: 0.10.0
libtpu: 0.0.40
codegen_flags: <defaults>
</compile_context>

<pallas_src>
import math

import jax
import jax.numpy as jnp
from jax import lax
from jax.experimental import pallas as pl
from jax.experimental.pallas import tpu as pltpu

_SQRT_HALF = 0.7071067811865476  # 1/sqrt(2)
_REP = 416                       # final width of the cat chain is 416 * D
_GELU_DEPTH = 6                  # gelu is applied 6x along the chain


def _gelu_exact(x):
    # PyTorch F.gelu default: exact erf formulation (not tanh approx).
    return 0.5 * x * (1.0 + lax.erf(x * _SQRT_HALF))


def _gelu_tile_kernel(x_ref, o_ref, chunk_ref):
    """x_ref: (tile_rows, D); o_ref: (tile_rows, rep_tile*D); chunk_ref: lane-dense scratch."""
    tile_rows, d = x_ref.shape
    chunk_w = chunk_ref.shape[-1]
    block_w = o_ref.shape[-1]

    # Build gelu^6 and the lane-dense replicated chunk once per row tile.
    @pl.when(pl.program_id(1) == 0)
    def _build_chunk():
        g = x_ref[...]
        for _ in range(_GELU_DEPTH):
            g = _gelu_exact(g)
        g = g.astype(o_ref.dtype)  # cast once on the small slab, not the wide output
        if chunk_w == d:
            c = g
        else:
            # chunk[:, j] = g[:, j % d], built only over a small (<=512 lane) width.
            lane = lax.broadcasted_iota(jnp.int32, (tile_rows, chunk_w), 1) % d
            c = jnp.broadcast_to(g[:, 0:1], (tile_rows, chunk_w))
            for k in range(1, d):
                c = jnp.where(
                    lane == k,
                    jnp.broadcast_to(g[:, k:k + 1], (tile_rows, chunk_w)),
                    c,
                )
        chunk_ref[...] = c

    # Fill the output block with full-width stores of the precomputed chunk:
    # one pass over the output, no per-element math.
    c = chunk_ref[...]
    n_full = block_w // chunk_w
    for r in range(n_full):
        o_ref[:, r * chunk_w:(r + 1) * chunk_w] = c
    rem = block_w - n_full * chunk_w
    if rem:
        o_ref[:, n_full * chunk_w:n_full * chunk_w + rem] = c[:, :rem]


def _divisors(n):
    return [k for k in range(1, n + 1) if n % k == 0]


def _choose_row_tile(rows):
    if rows % 8 == 0:
        for t in (512, 256, 128, 64, 32, 16, 8):
            if rows % t == 0:
                return t
    return rows  # tiny / unaligned row counts: use the full extent


def _choose_rep_tile(d, tile_rows, itemsize, budget_bytes=8 << 20):
    # Prefer the whole output width per block (most lane-dense; fine for this
    # module). Only split the rep axis if the block would blow the VMEM budget
    # AND a 128-lane-aligned divisor of _REP exists.
    if tile_rows * _REP * d * itemsize <= budget_bytes:
        return _REP
    if tile_rows % 8 == 0:
        for cand in sorted(_divisors(_REP), reverse=True):
            if cand == _REP:
                continue
            if (cand * d) % 128:
                continue
            if tile_rows * cand * d * itemsize <= budget_bytes:
                return cand
    return _REP


def _chunk_width(d, block_w):
    # Smallest lane-dense width: lcm(d, 128), scaled up toward ~512 lanes.
    base = d * (128 // math.gcd(d, 128))  # lcm(d, 128)
    if base >= block_w:
        return block_w
    return min(base * max(1, 512 // base), block_w)


def model_forward(x):
    B, R, D = x.shape
    rows = B * R
    W = _REP * D
    itemsize = jnp.dtype(x.dtype).itemsize

    x2d = x.reshape(rows, D)

    tile_rows = _choose_row_tile(rows)
    rep_tile = _choose_rep_tile(D, tile_rows, itemsize)
    block_w = rep_tile * D
    chunk_w = _chunk_width(D, block_w)

    n_row = rows // tile_rows
    n_rep = _REP // rep_tile

    out2d = pl.pallas_call(
        _gelu_tile_kernel,
        out_shape=jax.ShapeDtypeStruct((rows, W), x.dtype),
        grid_spec=pltpu.PrefetchScalarGridSpec(
            num_scalar_prefetch=0,
            grid=(n_row, n_rep),
            in_specs=[pl.BlockSpec((tile_rows, D), lambda i, r: (i, 0))],
            out_specs=pl.BlockSpec((tile_rows, block_w), lambda i, r: (i, r)),
            scratch_shapes=[pltpu.VMEM((tile_rows, chunk_w), x.dtype)],
        ),
        compiler_params=pltpu.CompilerParams(
            dimension_semantics=("parallel", "arbitrary"),
            vmem_limit_bytes=32 * 1024 * 1024,
        ),
        cost_estimate=pl.CostEstimate(
            flops=int(rows * D * 10 * _GELU_DEPTH),
            transcendentals=int(rows * D * _GELU_DEPTH),
            bytes_accessed=int((rows * D + rows * W) * itemsize),
        ),
    )(x2d)

    return out2d.reshape(B, R, W)


if __name__ == "__main__":
    key = jax.random.PRNGKey(0)
    x1 = jax.random.normal(key, (1, 2, 2), dtype=jnp.float32)

    out = jax.block_until_ready(model_forward(x1))

    # Pure-JAX reference of the original torch graph.
    g = x1
    for _ in range(_GELU_DEPTH):
        g = _gelu_exact(g)
    ref = jnp.tile(g, (1, 1, _REP))

    assert out.shape == (1, 2, 2 * _REP), out.shape
    assert jnp.allclose(out, ref, atol=1e-6), "mismatch vs reference"
    print("KERNEL_OK")
</pallas_src>

<mosaic_0001>
module attributes {stable_mosaic.version = 11 : i64} {
  func.func @_gelu_tile_kernel(%arg0: i32, %arg1: i32, %arg2: memref<2x2xf32, #tpu.memory_space<vmem>>, %arg3: memref<2x832xf32, #tpu.memory_space<vmem>>, %arg4: memref<2x512xf32, #tpu.memory_space<vmem>>) attributes {dimension_semantics = [#tpu.dimension_semantics<parallel>, #tpu.dimension_semantics<arbitrary>], iteration_bounds = array<i64: 1, 1>, scalar_prefetch = 0 : i64, scratch_operands = 1 : i64, tpu.core_type = #tpu.core_type<tc>, window_params = [{transform_indices = @transform_0, window_bounds = array<i64: 2, 2>}, {transform_indices = @transform_1, window_bounds = array<i64: 2, 832>}]} {
    %c0_i32 = arith.constant 0 : i32
    %0 = arith.cmpi eq, %arg1, %c0_i32 : i32
    %1 = arith.extui %0 : i1 to i32
    %c0_i32_0 = arith.constant 0 : i32
    %2 = arith.cmpi ne, %1, %c0_i32_0 : i32
    scf.if %2 {
      %c0_5 = arith.constant 0 : index
      %c0_6 = arith.constant 0 : index
      %7 = vector.load %arg2[%c0_5, %c0_6] : memref<2x2xf32, #tpu.memory_space<vmem>>, vector<2x2xf32>
      %cst = arith.constant 5.000000e-01 : f32
      %8 = vector.broadcast %cst : f32 to vector<2x2xf32>
      %9 = arith.mulf %8, %7 : vector<2x2xf32>
      %cst_7 = arith.constant 0.707106769 : f32
      %10 = vector.broadcast %cst_7 : f32 to vector<2x2xf32>
      %11 = arith.mulf %7, %10 : vector<2x2xf32>
      %12 = math.erf %11 : vector<2x2xf32>
      %cst_8 = arith.constant 1.000000e+00 : f32
      %13 = vector.broadcast %cst_8 : f32 to vector<2x2xf32>
      %14 = arith.addf %13, %12 : vector<2x2xf32>
      %15 = arith.mulf %9, %14 : vector<2x2xf32>
      %cst_9 = arith.constant 5.000000e-01 : f32
      %16 = vector.broadcast %cst_9 : f32 to vector<2x2xf32>
      %17 = arith.mulf %16, %15 : vector<2x2xf32>
      %cst_10 = arith.constant 0.707106769 : f32
      %18 = vector.broadcast %cst_10 : f32 to vector<2x2xf32>
      %19 = arith.mulf %15, %18 : vector<2x2xf32>
      %20 = math.erf %19 : vector<2x2xf32>
      %cst_11 = arith.constant 1.000000e+00 : f32
      %21 = vector.broadcast %cst_11 : f32 to vector<2x2xf32>
      %22 = arith.addf %21, %20 : vector<2x2xf32>
      %23 = arith.mulf %17, %22 : vector<2x2xf32>
      %cst_12 = arith.constant 5.000000e-01 : f32
      %24 = vector.broadcast %cst_12 : f32 to vector<2x2xf32>
      %25 = arith.mulf %24, %23 : vector<2x2xf32>
      %cst_13 = arith.constant 0.707106769 : f32
      %26 = vector.broadcast %cst_13 : f32 to vector<2x2xf32>
      %27 = arith.mulf %23, %26 : vector<2x2xf32>
      %28 = math.erf %27 : vector<2x2xf32>
      %cst_14 = arith.constant 1.000000e+00 : f32
      %29 = vector.broadcast %cst_14 : f32 to vector<2x2xf32>
      %30 = arith.addf %29, %28 : vector<2x2xf32>
      %31 = arith.mulf %25, %30 : vector<2x2xf32>
      %cst_15 = arith.constant 5.000000e-01 : f32
      %32 = vector.broadcast %cst_15 : f32 to vector<2x2xf32>
      %33 = arith.mulf %32, %31 : vector<2x2xf32>
      %cst_16 = arith.constant 0.707106769 : f32
      %34 = vector.broadcast %cst_16 : f32 to vector<2x2xf32>
      %35 = arith.mulf %31, %34 : vector<2x2xf32>
      %36 = math.erf %35 : vector<2x2xf32>
      %cst_17 = arith.constant 1.000000e+00 : f32
      %37 = vector.broadcast %cst_17 : f32 to vector<2x2xf32>
      %38 = arith.addf %37, %36 : vector<2x2xf32>
      %39 = arith.mulf %33, %38 : vector<2x2xf32>
      %cst_18 = arith.constant 5.000000e-01 : f32
      %40 = vector.broadcast %cst_18 : f32 to vector<2x2xf32>
      %41 = arith.mulf %40, %39 : vector<2x2xf32>
      %cst_19 = arith.constant 0.707106769 : f32
      %42 = vector.broadcast %cst_19 : f32 to vector<2x2xf32>
      %43 = arith.mulf %39, %42 : vector<2x2xf32>
      %44 = math.erf %43 : vector<2x2xf32>
      %cst_20 = arith.constant 1.000000e+00 : f32
      %45 = vector.broadcast %cst_20 : f32 to vector<2x2xf32>
      %46 = arith.addf %45, %44 : vector<2x2xf32>
      %47 = arith.mulf %41, %46 : vector<2x2xf32>
      %cst_21 = arith.constant 5.000000e-01 : f32
      %48 = vector.broadcast %cst_21 : f32 to vector<2x2xf32>
      %49 = arith.mulf %48, %47 : vector<2x2xf32>
      %cst_22 = arith.constant 0.707106769 : f32
      %50 = vector.broadcast %cst_22 : f32 to vector<2x2xf32>
      %51 = arith.mulf %47, %50 : vector<2x2xf32>
      %52 = math.erf %51 : vector<2x2xf32>
      %cst_23 = arith.constant 1.000000e+00 : f32
      %53 = vector.broadcast %cst_23 : f32 to vector<2x2xf32>
      %54 = arith.addf %53, %52 : vector<2x2xf32>
      %55 = arith.mulf %49, %54 : vector<2x2xf32>
      %56 = tpu.iota {dimensions = array<i32: 1>} : vector<2x512xi32>
      %c2_i32 = arith.constant 2 : i32
      %c0_i32_24 = arith.constant 0 : i32
      %57 = arith.cmpi eq, %c2_i32, %c0_i32_24 : i32
      %c1_i32 = arith.constant 1 : i32
      %58 = arith.select %57, %c1_i32, %c2_i32 : i32
      %59 = vector.broadcast %58 : i32 to vector<2x512xi32>
      %60 = arith.remsi %56, %59 : vector<2x512xi32>
      %c0_i32_25 = arith.constant 0 : i32
      %61 = vector.broadcast %c0_i32_25 : i32 to vector<2x512xi32>
      %62 = arith.cmpi ne, %60, %61 : vector<2x512xi32>
      %c0_i32_26 = arith.constant 0 : i32
      %63 = vector.broadcast %c0_i32_26 : i32 to vector<2x512xi32>
      %64 = arith.cmpi slt, %60, %63 : vector<2x512xi32>
      %c0_i32_27 = arith.constant 0 : i32
      %65 = arith.cmpi slt, %58, %c0_i32_27 : i32
      %66 = vector.broadcast %65 : i1 to vector<2x512xi1>
      %67 = vector.broadcast %66 : vector<2x512xi1> to vector<2x512xi1>
      %68 = arith.xori %64, %67 : vector<2x512xi1>
      %69 = arith.andi %68, %62 : vector<2x512xi1>
      %70 = vector.broadcast %58 : i32 to vector<2x512xi32>
      %71 = arith.addi %60, %70 : vector<2x512xi32>
      %72 = arith.select %69, %71, %60 : vector<2x512xi1>, vector<2x512xi32>
      %73 = vector.extract_strided_slice %55 {offsets = [0, 0], sizes = [2, 1], strides = [1, 1]} : vector<2x2xf32> to vector<2x1xf32>
      %74 = vector.shape_cast %73 : vector<2x1xf32> to vector<2x1xf32>
      %75 = vector.broadcast %74 : vector<2x1xf32> to vector<2x512xf32>
      %c1_i32_28 = arith.constant 1 : i32
      %76 = vector.broadcast %c1_i32_28 : i32 to vector<2x512xi32>
      %77 = arith.cmpi eq, %72, %76 : vector<2x512xi32>
      %78 = vector.extract_strided_slice %55 {offsets = [0, 1], sizes = [2, 1], strides = [1, 1]} : vector<2x2xf32> to vector<2x1xf32>
      %79 = vector.shape_cast %78 : vector<2x1xf32> to vector<2x1xf32>
      %80 = vector.broadcast %79 : vector<2x1xf32> to vector<2x512xf32>
      %81 = arith.select %77, %80, %75 : vector<2x512xi1>, vector<2x512xf32>
      %c0_29 = arith.constant 0 : index
      %c0_30 = arith.constant 0 : index
      %82 = vector.load %arg4[%c0_29, %c0_30] : memref<2x512xf32, #tpu.memory_space<vmem>>, vector<2x512xf32>
      tpu.vector_store %arg4[%c0_29, %c0_30], %81 {strides = array<i32>} : memref<2x512xf32, #tpu.memory_space<vmem>>, vector<2x512xf32>,
    } else {
    }
    %c0 = arith.constant 0 : index
    %c0_1 = arith.constant 0 : index
    %3 = vector.load %arg4[%c0, %c0_1] : memref<2x512xf32, #tpu.memory_space<vmem>>, vector<2x512xf32>
    %c0_2 = arith.constant 0 : index
    %c0_3 = arith.constant 0 : index
    %4 = vector.load %arg3[%c0_2, %c0_3] : memref<2x832xf32, #tpu.memory_space<vmem>>, vector<2x512xf32>
    tpu.vector_store %arg3[%c0_2, %c0_3], %3 {strides = array<i32>} : memref<2x832xf32, #tpu.memory_space<vmem>>, vector<2x512xf32>,
    %5 = vector.extract_strided_slice %3 {offsets = [0, 0], sizes = [2, 320], strides = [1, 1]} : vector<2x512xf32> to vector<2x320xf32>
    %c0_4 = arith.constant 0 : index
    %c512 = arith.constant 512 : index
    %6 = vector.load %arg3[%c0_4, %c512] : memref<2x832xf32, #tpu.memory_space<vmem>>, vector<2x320xf32>
    tpu.vector_store %arg3[%c0_4, %c512], %5 {strides = array<i32>} : memref<2x832xf32, #tpu.memory_space<vmem>>, vector<2x320xf32>,
    return
  }
  func.func @transform_0(%arg0: i32, %arg1: i32) -> (i32, i32) {
    %c0_i32 = arith.constant 0 : i32
    %c0_i32_0 = arith.constant 0 : i32
    return %arg0, %c0_i32 : i32, i32
  }
  func.func @transform_1(%arg0: i32, %arg1: i32) -> (i32, i32) {
    %c0_i32 = arith.constant 0 : i32
    return %arg0, %arg1 : i32, i32
  }
}

</mosaic_0001>

<llo_original>
// kernel: tpu_custom_call.1
$region0: #{tpu_custom_call.1}
  #allocation0 [shape = 'u32[]', space=smem, size = 0x4, offset = 0x4, fixed_abs, tag = 'smem constant byte address 0x4 - core index']
  #allocation1 [shape = 'u32[144,128]{1,0:T(1,128)}', space=vmem, size = 0x12000, scoped, tag = 'internal scratch']
  #allocation2 [shape = 'f32[2,512]{1,0:T(2,128)}', space=vmem, size = 0x1000, scoped, tag = 'scratch operand']
  %s0 = inlined_call_operand.hbm [shape: f32[2,2], index: 0, kind: input, shape index: {}]
  %s1 = inlined_call_operand.hbm [shape: f32[2,832], index: 1, kind: output, shape index: {}]
  %s2 = sld [smem:[#allocation0]]
  $region22: #{tpu_custom_call.1} parent=0
    _
  %s4 = ssub.s32 1, %s2
  %s5 = scalar_select 0, %s4, %s2
  $region1: #{tpu_custom_call.1} parent=0
    #allocation3 [shape = 'u8[1024]{0}', space=vmem, size = 0x400, scoped, tag = 'input window, operand 0, single buffered']
    #allocation4 [shape = 's32[1]{0}', space=sflag, size = 0x4, scoped, tag = 'scoped memory for tpu_custom_call.1']
    #allocation5 [shape = 's32[1]{0}', space=sflag, size = 0x4, scoped, tag = 'scoped memory for tpu_custom_call.1']
    #allocation6 [shape = 'u8[7168]{0}', space=vmem, size = 0x1c00, scoped, tag = 'output window, operand 0, single buffered']
    %6 = vsyncpa [#allocation4], 0
    %7 = vsyncpa [#allocation5], 0
    // Predicated region
    $region2: #{tpu_custom_call.1} parent=1 // pred_check
      _
    $region3: #{tpu_custom_call.1} parent=1 // pred_check_branch
      %9 = sbr.rel (0) target = $region5
    $region4: #{tpu_custom_call.1} parent=1 // pred_region
      %s11 = ssub.s32 32, 32
      %12 = vsyncadd [#allocation4], %s11
      %s14 = sshll.u32 [#allocation3], 4
      %s15 = int_to_ptr.vmem [resolvable:$true] %s14
      %17 = dma.hbm_to_vmem [thread:$0]  %s0, 32, %s15, [#allocation4]
    $region5: #{tpu_custom_call.1} parent=1 // pred_fallthru
      _
    // Predicated region
    $region6: #{tpu_custom_call.1} parent=1 // pred_check
      _
    $region7: #{tpu_custom_call.1} parent=1 // pred_check_branch
      %19 = sbr.rel (0) target = $region9
    $region8: #{tpu_custom_call.1} parent=1 // pred_region
      %20 = dma.done [#allocation4], 32
    $region9: #{tpu_custom_call.1} parent=1 // pred_fallthru
      _
    %p21 = scmp.eq.s32.totalorder 0, 0
    // Predicated region
    $region10: #{tpu_custom_call.1} parent=1 // pred_check
      %p22 = pneg %p21
    $region11: #{tpu_custom_call.1} parent=1 // pred_check_branch
      %24 = sbr.rel (%p22) target = $region13
    $region12: #{tpu_custom_call.1} parent=1 // pred_region
      %v25 = vld [vmem:[#allocation3] sm:$0x3]
      %v26 = vmul.f32 %v25, 0.5
      %v27 = vmul.f32 %v25, 0.70710677
      %v28 = verf.f32.pop %v27
      %v29 = vadd.f32 %v28, 1.0
      %v30 = vmul.f32 %v26, %v29
      %v31 = vmul.f32 %v30, 0.5
      %v32 = vmul.f32 %v30, 0.70710677
      %v33 = verf.f32.pop %v32
      %v34 = vadd.f32 %v33, 1.0
      %v35 = vmul.f32 %v31, %v34
      %v36 = vmul.f32 %v35, 0.5
      %v37 = vmul.f32 %v35, 0.70710677
      %v38 = verf.f32.pop %v37
      %v39 = vadd.f32 %v38, 1.0
      %v40 = vmul.f32 %v36, %v39
      %v41 = vmul.f32 %v40, 0.5
      %v42 = vmul.f32 %v40, 0.70710677
      %v43 = verf.f32.pop %v42
      %v44 = vadd.f32 %v43, 1.0
      %v45 = vmul.f32 %v41, %v44
      %v46 = vmul.f32 %v45, 0.5
      %v47 = vmul.f32 %v45, 0.70710677
      %v48 = verf.f32.pop %v47
      %v49 = vadd.f32 %v48, 1.0
      %v50 = vmul.f32 %v46, %v49
      %v51 = vmul.f32 %v50, 0.5
      %v52 = vmul.f32 %v50, 0.70710677
      %v53 = verf.f32.pop %v52
      %v54 = vadd.f32 %v53, 1.0
      %v55 = vmul.f32 %v51, %v54
      %v56 = vlaneseq
      %v57 = vand.u32 %v56, 127
      %v58 = vadd.s32 %v57, 128
      %v59 = vadd.s32 %v57, 256
      %v60 = vadd.s32 %v57, 384
      %vm61 = vcmp.lt.s32.totalorder %v57, 0
      %v62 = vsub.s32 0, %v57
      %v63 = vsel %vm61, %v62, %v57
      %v64 = vshrl.u32 %v63, 1
      %v65 = vand.u32 %v63, 1
      %v66 = vsub.s32 0, %v65
      %v67 = vsel %vm61, %v66, %v65
      %vm68 = vcmp.lt.s32.totalorder %v58, 0
      %v69 = vsub.s32 0, %v58
      %v70 = vsel %vm68, %v69, %v58
      %v71 = vshrl.u32 %v70, 1
      %v72 = vand.u32 %v70, 1
      %v73 = vsub.s32 0, %v72
      %v74 = vsel %vm68, %v73, %v72
      %vm75 = vcmp.lt.s32.totalorder %v59, 0
      %v76 = vsub.s32 0, %v59
      %v77 = vsel %vm75, %v76, %v59
      %v78 = vshrl.u32 %v77, 1
      %v79 = vand.u32 %v77, 1
      %v80 = vsub.s32 0, %v79
      %v81 = vsel %vm75, %v80, %v79
      %vm82 = vcmp.lt.s32.totalorder %v60, 0
      %v83 = vsub.s32 0, %v60
      %v84 = vsel %vm82, %v83, %v60
      %v85 = vshrl.u32 %v84, 1
      %v86 = vand.u32 %v84, 1
      %v87 = vsub.s32 0, %v86
      %v88 = vsel %vm82, %v87, %v86
      %vm89 = vcmp.ne.s32.totalorder %v67, 0
      %vm90 = vcmp.ne.s32.totalorder %v74, 0
      %vm91 = vcmp.ne.s32.totalorder %v81, 0
      %vm92 = vcmp.ne.s32.totalorder %v88, 0
      %vm93 = vcmp.lt.s32.totalorder %v67, 0
      %vm94 = vcmp.lt.s32.totalorder %v74, 0
      %vm95 = vcmp.lt.s32.totalorder %v81, 0
      %vm96 = vcmp.lt.s32.totalorder %v88, 0
      %vm97 = vmand %vm93, %vm89
      %vm98 = vmand %vm94, %vm90
      %vm99 = vmand %vm95, %vm91
      %vm100 = vmand %vm96, %vm92
      %v101 = vadd.s32 %v67, 2
      %v102 = vadd.s32 %v74, 2
      %v103 = vadd.s32 %v81, 2
      %v104 = vadd.s32 %v88, 2
      %v105 = vsel %vm97, %v101, %v67
      %v106 = vsel %vm98, %v102, %v74
      %v107 = vsel %vm99, %v103, %v81
      %v108 = vsel %vm100, %v104, %v88
      %110 = vset.pattern.permute.xlu0 0
      %111 = vperm.xlu0 %110, %v55
      %v112 = vpop.permute.xlu0 %111
      %vm114 = vcmp.eq.s32.totalorder %v105, 1
      %vm115 = vcmp.eq.s32.totalorder %v106, 1
      %vm116 = vcmp.eq.s32.totalorder %v107, 1
      %vm117 = vcmp.eq.s32.totalorder %v108, 1
      %118 = vset.pattern.permute.xlu0 1
      %119 = vperm.xlu0 %118, %v55
      %v120 = vpop.permute.xlu0 %119
      %v122 = vsel %vm114, %v120, %v112
      %v123 = vsel %vm115, %v120, %v112
      %v124 = vsel %vm116, %v120, %v112
      %v125 = vsel %vm117, %v120, %v112
      %v130 = vcombine.low %v122, %v123
      %v131 = vcombine.low %v124, %v125
      %v133 = vunpack.c.l.s4 1983009808
      %v134 = vunpack.c.0.s8 %v133
      %v135 = vlaneseq
      %v136 = vshrl.u32 %v135, 7
      %v137 = vsub.s32 %v134, %v136
      %v138 = vrot.slane %v130, %v137
      %v140 = vunpack.c.l.s4 1983009808
      %v141 = vunpack.c.0.s8 %v140
      %v142 = vlaneseq
      %v143 = vshrl.u32 %v142, 7
      %v144 = vsub.s32 %v141, %v143
      %v145 = vrot.slane %v131, %v144
      %v146 = vcombine.low %v138, %v145
      %148 = vst [vmem:[#allocation2] sm:$0xff] %v146
    $region13: #{tpu_custom_call.1} parent=1 // pred_fallthru
      _
    %v149 = vld [vmem:[#allocation2] sm:$0xff]
    %150 = vst [vmem:[#allocation6] sm:$0xff] %v149
    %vm151 = vcmask 1041408
    %vm152 = vcmask 1043458
    %vm153 = vmor %vm152, %vm151
    %vm154 = vcmask 521220
    %vm155 = vmor %vm154, %vm153
    %156 = vst.msk [vmem:[#allocation6 + $0x8] sm:$0x3f] %vm155, %v149
    // Predicated region
    $region14: #{tpu_custom_call.1} parent=1 // pred_check
      _
    $region15: #{tpu_custom_call.1} parent=1 // pred_check_branch
      %158 = sbr.rel (0) target = $region17
    $region16: #{tpu_custom_call.1} parent=1 // pred_region
      %s160 = ssub.s32 224, 224
      %161 = vsyncadd [#allocation5], %s160
      %s163 = sshll.u32 [#allocation6], 4
      %s164 = int_to_ptr.vmem [resolvable:$true] %s163
      %166 = dma.vmem_to_hbm [thread:$0]  %s164, 224, %s1, [#allocation5]
    $region17: #{tpu_custom_call.1} parent=1 // pred_fallthru
      _
    // Predicated region
    $region18: #{tpu_custom_call.1} parent=1 // pred_check
      _
    $region19: #{tpu_custom_call.1} parent=1 // pred_check_branch
      %168 = sbr.rel (0) target = $region21
    $region20: #{tpu_custom_call.1} parent=1 // pred_region
      %169 = dma.done [#allocation5], 224
    $region21: #{tpu_custom_call.1} parent=1 // pred_fallthru
      _
    %170 = vsyncpa [#allocation4], 1
    %171 = vsyncpa [#allocation5], 1

</llo_original>
